<compile_context>
chip_gen: v7x
topology: tpu7x:2x2x1
jax: 0.10.0
libtpu: 0.0.40
codegen_flags: <defaults>
</compile_context>

<pallas_src>
import jax
import jax.numpy as jnp
from jax import lax
from jax.experimental import pallas as pl
from jax.experimental.pallas import tpu as pltpu


def _round_up(x, m):
    return ((x + m - 1) // m) * m


def _const_index_map(ndim):
    return lambda i: (0,) * ndim


def _make_reward_kernel(n_layers, n_mid, out_dim, compute_dtype, chunk, n_chunks):
    """Kernel body: all layers fused, computed feature-major per lane chunk."""

    def kernel(*refs):
        x_ref = refs[0]           # (tb, input_dim)  batch on sublanes
        o_ref = refs[-1]          # (out_dim, tb)    f32, batch on lanes
        wb = refs[1:-1]

        w0_ref, b0_ref = wb[0], wb[1]
        if n_mid > 0:
            wm_ref, bm_ref = wb[2], wb[3]
        if n_layers > 1:
            wl_ref, bl_ref = wb[-2], wb[-1]

        # Static unroll over lane chunks: the (hidden, chunk) activation stays
        # in vregs for the whole layer stack; all slice offsets are static and
        # 128-lane aligned.
        for c in range(n_chunks):
            off = c * chunk
            xc = x_ref[off:off + chunk, :].astype(compute_dtype)   # (chunk, in)

            # Layer 0: contract the feature axis of both operands so the
            # result is (hidden_or_out, chunk) with batch on lanes.
            h = lax.dot_general(
                w0_ref[...], xc,
                dimension_numbers=(((1,), (1,)), ((), ())),
                preferred_element_type=jnp.float32) + b0_ref[...]

            if n_layers == 1:
                out = h
            else:
                h = jnp.maximum(h, 0.0)                            # f32 epilogue
                for l in range(n_mid):
                    h = jnp.dot(wm_ref[l], h.astype(compute_dtype),
                                preferred_element_type=jnp.float32) + bm_ref[l]
                    h = jnp.maximum(h, 0.0)
                if out_dim == 1:
                    # Final Linear(hidden, 1): VPU multiply + sublane (XLU)
                    # reduction; lane-dense (1, chunk) result.
                    out = jnp.sum(h * wl_ref[...], axis=0, keepdims=True) + bl_ref[...]
                else:
                    out = jnp.dot(wl_ref[...], h.astype(compute_dtype),
                                  preferred_element_type=jnp.float32) + bl_ref[...]

            o_ref[:, off:off + chunk] = out.astype(o_ref.dtype)

    return kernel


def reward_model_forward(x, params, *, block_b=2048, lane_chunk=256,
                         compute_dtype=jnp.bfloat16):
    """Forward pass of Reward_Model.

    x      : (B, input_dim), batch-major (native PyTorch layout).
    params : list of (W, b) per nn.Linear, W: (out_features, in_features),
             b: (out_features,)  -- native nn.Linear layout.
    Returns (B, out_dim) float32.
    """
    B, input_dim = x.shape
    n_layers = len(params)
    out_dim = int(params[-1][0].shape[0])
    n_mid = max(n_layers - 2, 0)

    # ---- tiling ------------------------------------------------------------
    chunk = _round_up(min(lane_chunk, max(B, 1)), 128)     # lanes per in-kernel chunk
    tb = min(_round_up(block_b, chunk), _round_up(B, chunk))
    # v7x megacore: make the "parallel" batch axis have >= 2 steps when the
    # batch is big enough to split.
    if B > chunk and pl.cdiv(B, tb) < 2:
        tb = _round_up(pl.cdiv(B, 2), chunk)
    tb = max(tb, chunk)
    n_chunks = tb // chunk
    num_tiles = pl.cdiv(B, tb)
    b_pad = num_tiles * tb                 # output padded so every out block is full

    # ---- operands + BlockSpecs ----------------------------------------------
    flat_args = [x]
    in_specs = [pl.BlockSpec((tb, input_dim), lambda i: (i, 0))]

    def add_const(arr):
        flat_args.append(arr)
        in_specs.append(pl.BlockSpec(arr.shape, _const_index_map(arr.ndim)))

    if n_layers == 1:
        w, b = params[0]
        add_const(jnp.asarray(w, compute_dtype))                       # (out, in)
        add_const(jnp.asarray(b, jnp.float32).reshape(-1, 1))          # (out, 1)
    else:
        w0, b0 = params[0]
        add_const(jnp.asarray(w0, compute_dtype))                      # (hidden, in)
        add_const(jnp.asarray(b0, jnp.float32).reshape(-1, 1))         # (hidden, 1)
        if n_mid > 0:
            wm = jnp.stack([jnp.asarray(params[i][0], compute_dtype)
                            for i in range(1, n_layers - 1)])          # (n_mid, h, h)
            bm = jnp.stack([jnp.asarray(params[i][1], jnp.float32).reshape(-1, 1)
                            for i in range(1, n_layers - 1)])          # (n_mid, h, 1)
            add_const(wm)
            add_const(bm)
        wl, bl = params[-1]
        if out_dim == 1:
            add_const(jnp.asarray(wl, jnp.float32).reshape(-1, 1))     # (hidden, 1)
        else:
            add_const(jnp.asarray(wl, compute_dtype))                  # (out, hidden)
        add_const(jnp.asarray(bl, jnp.float32).reshape(-1, 1))         # (out, 1)

    weight_bytes = sum(int(a.size) * a.dtype.itemsize for a in flat_args[1:])

    # ---- cost estimate (scheduling hint) ------------------------------------
    flops = sum(2 * b_pad * int(w.shape[0]) * int(w.shape[1]) for w, _ in params)
    bytes_accessed = (int(x.size) * x.dtype.itemsize
                      + weight_bytes
                      + out_dim * b_pad * 4)

    # ---- compiler params -----------------------------------------------------
    cp_kwargs = dict(dimension_semantics=("parallel",))
    # Per-step footprint: double-buffered x / out tiles + resident weights.
    vmem_est = 2 * (tb * input_dim * x.dtype.itemsize + out_dim * tb * 4) \
        + 2 * weight_bytes
    if vmem_est > 12 * 1024 * 1024:
        cp_kwargs["vmem_limit_bytes"] = int(min(2 * vmem_est, 48 * 1024 * 1024))

    kernel = _make_reward_kernel(n_layers, n_mid, out_dim, compute_dtype,
                                 chunk, n_chunks)

    out_t = pl.pallas_call(
        kernel,
        out_shape=jax.ShapeDtypeStruct((out_dim, b_pad), jnp.float32),
        grid=(num_tiles,),
        in_specs=in_specs,
        out_specs=pl.BlockSpec((out_dim, tb), lambda i: (0, i)),
        compiler_params=pltpu.CompilerParams(**cp_kwargs),
        cost_estimate=pl.CostEstimate(flops=int(flops), transcendentals=0,
                                      bytes_accessed=int(bytes_accessed)),
    )(*flat_args)

    # (out_dim, b_pad) -> (B, out_dim); padded/garbage columns are discarded.
    return out_t[:, :B].T


def init_reward_model_params(key, input_dim, output_dim=1, n_layers=5, hidden_dim=64):
    """Kaiming-normal weights (matching Reward_Model.init_weights), zero bias.
    Weights use the native nn.Linear layout: (out_features, in_features)."""
    if n_layers == 1:
        dims = [(output_dim, input_dim)]
    else:
        dims = ([(hidden_dim, input_dim)]
                + [(hidden_dim, hidden_dim)] * (n_layers - 2)
                + [(output_dim, hidden_dim)])
    params = []
    for fan_out, fan_in in dims:
        key, wk = jax.random.split(key)
        std = jnp.sqrt(2.0 / fan_in)        # kaiming_normal_ (fan_in mode, relu gain)
        w = jax.random.normal(wk, (fan_out, fan_in), dtype=jnp.float32) * std
        b = jnp.zeros((fan_out,), dtype=jnp.float32)
        params.append((w, b))
    return params


def reward_model_reference(x, params):
    """Pure-JAX f32 reference matching the PyTorch module."""
    h = x
    n = len(params)
    for i, (w, b) in enumerate(params):
        h = jnp.dot(h, w.T, precision=jax.lax.Precision.HIGHEST) + b
        if i < n - 1:
            h = jnp.maximum(h, 0.0)
    return h


if __name__ == "__main__":
    key = jax.random.PRNGKey(0)
    k_x, k_p = jax.random.split(key)

    B = 300               # small, not a tile multiple: exercises partial blocks
    INPUT_DIM = 32
    HIDDEN = 64
    OUTPUT_DIM = 1
    N_LAYERS = 5

    x = jax.random.normal(k_x, (B, INPUT_DIM), dtype=jnp.float32)
    params = init_reward_model_params(k_p, INPUT_DIM, OUTPUT_DIM, N_LAYERS, HIDDEN)

    ref = reward_model_reference(x, params)

    # Default path: chunk=256, tb=256, 2 grid tiles (bf16 operands, f32 accum).
    out_a = jax.block_until_ready(reward_model_forward(x, params))
    # 3 tiles of 128 lanes, one chunk per tile.
    out_b = jax.block_until_ready(
        reward_model_forward(x, params, block_b=128, lane_chunk=128))
    # 2 tiles of 256 lanes, two chunks per tile (exercises the in-kernel chunk loop).
    out_c = jax.block_until_ready(
        reward_model_forward(x, params, block_b=256, lane_chunk=128))
    # Full f32 compute path.
    out_d = jax.block_until_ready(
        reward_model_forward(x, params, compute_dtype=jnp.float32))

    assert out_a.shape == (B, OUTPUT_DIM), out_a.shape
    assert out_b.shape == (B, OUTPUT_DIM), out_b.shape
    # Tiling / chunking must not change the math.
    assert jnp.allclose(out_a, out_b, atol=1e-4, rtol=1e-4)
    assert jnp.allclose(out_a, out_c, atol=1e-4, rtol=1e-4)
    # bf16-operand / f32-accumulate vs pure-f32 reference (bf16-level tolerance).
    assert jnp.allclose(out_a, ref, atol=1e-1, rtol=5e-2)
    # f32 compute path tracks the reference much more tightly.
    assert jnp.allclose(out_d, ref, atol=2e-2, rtol=2e-2)

    print("KERNEL_OK")
</pallas_src>

<mosaic_0001>
module attributes {stable_mosaic.version = 11 : i64} {
  func.func @kernel(%arg0: i32, %arg1: memref<256x32xf32, #tpu.memory_space<vmem>>, %arg2: memref<64x32xbf16, #tpu.memory_space<vmem>>, %arg3: memref<64x1xf32, #tpu.memory_space<vmem>>, %arg4: memref<3x64x64xbf16, #tpu.memory_space<vmem>>, %arg5: memref<3x64x1xf32, #tpu.memory_space<vmem>>, %arg6: memref<64x1xf32, #tpu.memory_space<vmem>>, %arg7: memref<1x1xf32, #tpu.memory_space<vmem>>, %arg8: memref<1x256xf32, #tpu.memory_space<vmem>>) attributes {dimension_semantics = [#tpu.dimension_semantics<parallel>], iteration_bounds = array<i64: 2>, scalar_prefetch = 0 : i64, scratch_operands = 0 : i64, tpu.core_type = #tpu.core_type<tc>, window_params = [{transform_indices = @transform_0, window_bounds = array<i64: 256, 32>}, {pipeline_mode = #tpu.pipeline_mode<synchronous>, transform_indices = @transform_1, window_bounds = array<i64: 64, 32>}, {pipeline_mode = #tpu.pipeline_mode<synchronous>, transform_indices = @transform_2, window_bounds = array<i64: 64, 1>}, {pipeline_mode = #tpu.pipeline_mode<synchronous>, transform_indices = @transform_3, window_bounds = array<i64: 3, 64, 64>}, {pipeline_mode = #tpu.pipeline_mode<synchronous>, transform_indices = @transform_4, window_bounds = array<i64: 3, 64, 1>}, {pipeline_mode = #tpu.pipeline_mode<synchronous>, transform_indices = @transform_5, window_bounds = array<i64: 64, 1>}, {pipeline_mode = #tpu.pipeline_mode<synchronous>, transform_indices = @transform_6, window_bounds = array<i64: 1, 1>}, {transform_indices = @transform_7, window_bounds = array<i64: 1, 256>}]} {
    %c0 = arith.constant 0 : index
    %c0_0 = arith.constant 0 : index
    %0 = vector.load %arg1[%c0, %c0_0] : memref<256x32xf32, #tpu.memory_space<vmem>>, vector<256x32xf32>
    %1 = arith.truncf %0 : vector<256x32xf32> to vector<256x32xbf16>
    %c0_1 = arith.constant 0 : index
    %c0_2 = arith.constant 0 : index
    %2 = vector.load %arg2[%c0_1, %c0_2] : memref<64x32xbf16, #tpu.memory_space<vmem>>, vector<64x32xbf16>
    %cst = arith.constant dense<0.000000e+00> : vector<64x256xf32>
    %3 = tpu.matmul %2, %1, %cst {dimension_numbers = #tpu.dot_dimension_numbers<[1], [1], [0], [0], [0, 0, 1, 0], [], []>} : vector<64x32xbf16>, vector<256x32xbf16>, vector<64x256xf32> -> vector<64x256xf32>
    %c0_3 = arith.constant 0 : index
    %c0_4 = arith.constant 0 : index
    %4 = vector.load %arg3[%c0_3, %c0_4] : memref<64x1xf32, #tpu.memory_space<vmem>>, vector<64x1xf32>
    %5 = vector.broadcast %4 : vector<64x1xf32> to vector<64x256xf32>
    %6 = arith.addf %3, %5 : vector<64x256xf32>
    %cst_5 = arith.constant 0.000000e+00 : f32
    %7 = vector.broadcast %cst_5 : f32 to vector<64x256xf32>
    %8 = arith.maximumf %6, %7 : vector<64x256xf32>
    %c0_6 = arith.constant 0 : index
    %c0_7 = arith.constant 0 : index
    %c0_8 = arith.constant 0 : index
    %9 = vector.load %arg4[%c0_6, %c0_7, %c0_8] : memref<3x64x64xbf16, #tpu.memory_space<vmem>>, vector<1x64x64xbf16>
    %10 = vector.shape_cast %9 : vector<1x64x64xbf16> to vector<64x64xbf16>
    %11 = arith.truncf %8 : vector<64x256xf32> to vector<64x256xbf16>
    %cst_9 = arith.constant dense<0.000000e+00> : vector<64x256xf32>
    %12 = tpu.matmul %10, %11, %cst_9 {dimension_numbers = #tpu.dot_dimension_numbers<[1], [0], [0], [1], [0, 0, 1, 1], [], []>} : vector<64x64xbf16>, vector<64x256xbf16>, vector<64x256xf32> -> vector<64x256xf32>
    %c0_10 = arith.constant 0 : index
    %c0_11 = arith.constant 0 : index
    %c0_12 = arith.constant 0 : index
    %13 = vector.load %arg5[%c0_10, %c0_11, %c0_12] : memref<3x64x1xf32, #tpu.memory_space<vmem>>, vector<1x64x1xf32>
    %14 = vector.shape_cast %13 : vector<1x64x1xf32> to vector<64x1xf32>
    %15 = vector.broadcast %14 : vector<64x1xf32> to vector<64x256xf32>
    %16 = arith.addf %12, %15 : vector<64x256xf32>
    %cst_13 = arith.constant 0.000000e+00 : f32
    %17 = vector.broadcast %cst_13 : f32 to vector<64x256xf32>
    %18 = arith.maximumf %16, %17 : vector<64x256xf32>
    %c1 = arith.constant 1 : index
    %c0_14 = arith.constant 0 : index
    %c0_15 = arith.constant 0 : index
    %19 = vector.load %arg4[%c1, %c0_14, %c0_15] : memref<3x64x64xbf16, #tpu.memory_space<vmem>>, vector<1x64x64xbf16>
    %20 = vector.shape_cast %19 : vector<1x64x64xbf16> to vector<64x64xbf16>
    %21 = arith.truncf %18 : vector<64x256xf32> to vector<64x256xbf16>
    %cst_16 = arith.constant dense<0.000000e+00> : vector<64x256xf32>
    %22 = tpu.matmul %20, %21, %cst_16 {dimension_numbers = #tpu.dot_dimension_numbers<[1], [0], [0], [1], [0, 0, 1, 1], [], []>} : vector<64x64xbf16>, vector<64x256xbf16>, vector<64x256xf32> -> vector<64x256xf32>
    %c1_17 = arith.constant 1 : index
    %c0_18 = arith.constant 0 : index
    %c0_19 = arith.constant 0 : index
    %23 = vector.load %arg5[%c1_17, %c0_18, %c0_19] : memref<3x64x1xf32, #tpu.memory_space<vmem>>, vector<1x64x1xf32>
    %24 = vector.shape_cast %23 : vector<1x64x1xf32> to vector<64x1xf32>
    %25 = vector.broadcast %24 : vector<64x1xf32> to vector<64x256xf32>
    %26 = arith.addf %22, %25 : vector<64x256xf32>
    %cst_20 = arith.constant 0.000000e+00 : f32
    %27 = vector.broadcast %cst_20 : f32 to vector<64x256xf32>
    %28 = arith.maximumf %26, %27 : vector<64x256xf32>
    %c2 = arith.constant 2 : index
    %c0_21 = arith.constant 0 : index
    %c0_22 = arith.constant 0 : index
    %29 = vector.load %arg4[%c2, %c0_21, %c0_22] : memref<3x64x64xbf16, #tpu.memory_space<vmem>>, vector<1x64x64xbf16>
    %30 = vector.shape_cast %29 : vector<1x64x64xbf16> to vector<64x64xbf16>
    %31 = arith.truncf %28 : vector<64x256xf32> to vector<64x256xbf16>
    %cst_23 = arith.constant dense<0.000000e+00> : vector<64x256xf32>
    %32 = tpu.matmul %30, %31, %cst_23 {dimension_numbers = #tpu.dot_dimension_numbers<[1], [0], [0], [1], [0, 0, 1, 1], [], []>} : vector<64x64xbf16>, vector<64x256xbf16>, vector<64x256xf32> -> vector<64x256xf32>
    %c2_24 = arith.constant 2 : index
    %c0_25 = arith.constant 0 : index
    %c0_26 = arith.constant 0 : index
    %33 = vector.load %arg5[%c2_24, %c0_25, %c0_26] : memref<3x64x1xf32, #tpu.memory_space<vmem>>, vector<1x64x1xf32>
    %34 = vector.shape_cast %33 : vector<1x64x1xf32> to vector<64x1xf32>
    %35 = vector.broadcast %34 : vector<64x1xf32> to vector<64x256xf32>
    %36 = arith.addf %32, %35 : vector<64x256xf32>
    %cst_27 = arith.constant 0.000000e+00 : f32
    %37 = vector.broadcast %cst_27 : f32 to vector<64x256xf32>
    %38 = arith.maximumf %36, %37 : vector<64x256xf32>
    %c0_28 = arith.constant 0 : index
    %c0_29 = arith.constant 0 : index
    %39 = vector.load %arg6[%c0_28, %c0_29] : memref<64x1xf32, #tpu.memory_space<vmem>>, vector<64x1xf32>
    %40 = vector.broadcast %39 : vector<64x1xf32> to vector<64x256xf32>
    %41 = arith.mulf %38, %40 : vector<64x256xf32>
    %cst_30 = arith.constant dense<0.000000e+00> : vector<256xf32>
    %42 = vector.multi_reduction <add>, %41, %cst_30 [0] : vector<64x256xf32> to vector<256xf32>
    %43 = vector.shape_cast %42 : vector<256xf32> to vector<1x256xf32>
    %c0_31 = arith.constant 0 : index
    %c0_32 = arith.constant 0 : index
    %44 = vector.load %arg7[%c0_31, %c0_32] : memref<1x1xf32, #tpu.memory_space<vmem>>, vector<1x1xf32>
    %45 = vector.broadcast %44 : vector<1x1xf32> to vector<1x256xf32>
    %46 = arith.addf %43, %45 : vector<1x256xf32>
    %c0_33 = arith.constant 0 : index
    %c0_34 = arith.constant 0 : index
    %47 = vector.load %arg8[%c0_33, %c0_34] : memref<1x256xf32, #tpu.memory_space<vmem>>, vector<1x256xf32>
    tpu.vector_store %arg8[%c0_33, %c0_34], %46 {strides = array<i32>} : memref<1x256xf32, #tpu.memory_space<vmem>>, vector<1x256xf32>,
    return
  }
  func.func @transform_0(%arg0: i32) -> (i32, i32) {
    %c0_i32 = arith.constant 0 : i32
    %c0_i32_0 = arith.constant 0 : i32
    return %arg0, %c0_i32 : i32, i32
  }
  func.func @transform_1(%arg0: i32) -> (i32, i32) {
    %c0_i32 = arith.constant 0 : i32
    %c0_i32_0 = arith.constant 0 : i32
    %c0_i32_1 = arith.constant 0 : i32
    return %c0_i32, %c0_i32_0 : i32, i32
  }
  func.func @transform_2(%arg0: i32) -> (i32, i32) {
    %c0_i32 = arith.constant 0 : i32
    %c0_i32_0 = arith.constant 0 : i32
    %c0_i32_1 = arith.constant 0 : i32
    return %c0_i32, %c0_i32_0 : i32, i32
  }
  func.func @transform_3(%arg0: i32) -> (i32, i32, i32) {
    %c0_i32 = arith.constant 0 : i32
    %c0_i32_0 = arith.constant 0 : i32
    %c0_i32_1 = arith.constant 0 : i32
    %c0_i32_2 = arith.constant 0 : i32
    return %c0_i32, %c0_i32_0, %c0_i32_1 : i32, i32, i32
  }
  func.func @transform_4(%arg0: i32) -> (i32, i32, i32) {
    %c0_i32 = arith.constant 0 : i32
    %c0_i32_0 = arith.constant 0 : i32
    %c0_i32_1 = arith.constant 0 : i32
    %c0_i32_2 = arith.constant 0 : i32
    return %c0_i32, %c0_i32_0, %c0_i32_1 : i32, i32, i32
  }
  func.func @transform_5(%arg0: i32) -> (i32, i32) {
    %c0_i32 = arith.constant 0 : i32
    %c0_i32_0 = arith.constant 0 : i32
    %c0_i32_1 = arith.constant 0 : i32
    return %c0_i32, %c0_i32_0 : i32, i32
  }
  func.func @transform_6(%arg0: i32) -> (i32, i32) {
    %c0_i32 = arith.constant 0 : i32
    %c0_i32_0 = arith.constant 0 : i32
    %c0_i32_1 = arith.constant 0 : i32
    return %c0_i32, %c0_i32_0 : i32, i32
  }
  func.func @transform_7(%arg0: i32) -> (i32, i32) {
    %c0_i32 = arith.constant 0 : i32
    %c0_i32_0 = arith.constant 0 : i32
    return %c0_i32, %arg0 : i32, i32
  }
}

</mosaic_0001>

<llo_original>
// kernel: tpu_custom_call.1
$region0: #{tpu_custom_call.1}
  #allocation0 [shape = 'u32[]', space=smem, size = 0x4, offset = 0x4, fixed_abs, tag = 'smem constant byte address 0x4 - core index']
  #allocation1 [shape = 'u32[144,128]{1,0:T(1,128)}', space=vmem, size = 0x12000, scoped, tag = 'internal scratch']
  #allocation2 [shape = 'f32[1,1]{1,0:T(1,128)S(1)}', space=vmem, size = 0x200, scoped, tag = 'scoped memory for tpu_custom_call.1']
  %s0 = inlined_call_operand.vmem [shape: f32[300,32], index: 0, kind: input, shape index: {}]
  %s1 = inlined_call_operand.vmem [shape: bf16[64,32], index: 1, kind: input, shape index: {}]
  %s2 = inlined_call_operand.vmem [shape: f32[64,1], index: 2, kind: input, shape index: {}]
  %s3 = inlined_call_operand.vmem [shape: bf16[3,64,64], index: 3, kind: input, shape index: {}]
  %s4 = inlined_call_operand.vmem [shape: f32[3,64,1], index: 4, kind: input, shape index: {}]
  %s5 = inlined_call_operand.vmem [shape: f32[64,1], index: 5, kind: input, shape index: {}]
  %s6 = inlined_call_operand.<no memory space> [shape: f32[1,1], index: 6, kind: input, shape index: {}]
  %s7 = inlined_call_operand.hbm [shape: f32[1,512], index: 7, kind: output, shape index: {}]
  %s8 = sld [smem:[#allocation0]]
  $region61: #{tpu_custom_call.1} parent=0
    _
  %s10 = ssub.s32 1, %s8
  %s11 = scalar_select 0, %s10, %s8
  %v12 = vstv %s6
  %13 = vst [vmem:[#allocation2] sm:$0x1] %v12
  $region1: #{tpu_custom_call.1} parent=0
    #allocation3 [shape = 'u8[2048]{0}', space=vmem, size = 0x800, scoped, tag = 'output window, operand 0']
    #allocation4 [shape = 's32[2]{0}', space=sflag, size = 0x8, scoped, tag = 'scoped memory for tpu_custom_call.1']
    %14 = vsyncpa [#allocation4], 0
    %s15 = scalar_lea.sflag [#allocation4], 1
    %16 = vsyncpa %s15, 0
    loop: start=0, step=1, limit=4
    $region2: #{tpu_custom_call.1} parent=1 // loop_pre_header
      _
    $region3: #{tpu_custom_call.1} parent=1 // loop_header
      %s18 = sphi 0, %s22
      %p19 = scmp.ge.s32.totalorder %s18, 4
      %s28 = sphi 0, %s30
      %s31 = sphi 0, %s28
      %s32 = sphi 0, %s31
      %s48 = sphi 0, %s32
      %s52 = sphi 0, %s52
      %s54 = sphi 0, %s52
      %s55 = sphi 0, %s54
      %s69 = sphi 0, %s55
      %s73 = sphi 0, %s73
      %s75 = sphi 0, %s73
      %s76 = sphi 0, %s75
      %s90 = sphi 0, %s76
      %s94 = sphi 0, %s94
      %s96 = sphi 0, %s94
      %s97 = sphi 0, %s96
      %s111 = sphi 0, %s97
      %s115 = sphi 0, %s115
      %s117 = sphi 0, %s115
      %s118 = sphi 0, %s117
      %s132 = sphi 0, %s118
      %s136 = sphi 0, %s136
      %s138 = sphi 0, %s136
      %s139 = sphi 0, %s138
      %s153 = sphi 0, %s139
      %s157 = sphi 0, %s157
      %s159 = sphi 0, %s157
      %s160 = sphi 0, %s159
      %s174 = sphi 0, %s160
      %s180 = sphi 0, %s182
      %s183 = sphi 0, %s180
      %s184 = sphi 0, %s183
      %s200 = sphi 0, %s184
    $region4: #{tpu_custom_call.1} parent=1 // loop_header_branch
      %21 = sbr.rel (%p19) target = $region8
    $region5: #{tpu_custom_call.1} parent=1 // loop_body
      %s23 = ssub.s32 %s18, 1
      %s24 = ssub.s32 %s18, 2
      %s25 = sadd.s32 %s18, 1
      %s26 = ssub.s32 %s18, %s25
      %p27 = scmp.eq.s32.totalorder %s26, 0
      %s29 = sadd.s32 %s28, 1
      %s30 = scalar_select %p27, %s28, %s29
      %p33 = pneg %p27
      %p34 = scmp.eq.s32.totalorder %s18, 1
      %p35 = por %p33, %p34
      %p36 = scmp.ne.s32.totalorder %s28, %s31
      %p37 = scmp.eq.s32.totalorder %s18, 0
      %p38 = por %p36, %p37
      %p39 = scmp.ne.s32.totalorder %s28, %s31
      %p40 = scmp.eq.s32.totalorder %s23, 1
      %p41 = por %p39, %p40
      %p42 = scmp.ne.s32.totalorder %s31, %s32
      %p43 = scmp.eq.s32.totalorder %s23, 0
      %p44 = por %p42, %p43
      %p45 = scmp.ne.s32.totalorder %s31, %s32
      %p46 = scmp.eq.s32.totalorder %s24, 1
      %p47 = por %p45, %p46
      %p49 = scmp.ne.s32.totalorder %s32, %s48
      %p50 = scmp.eq.s32.totalorder %s24, 0
      %p51 = por %p49, %p50
      %s53 = sadd.s32 %s52, 1
      %p56 = scmp.eq.s32.totalorder %s18, 1
      %p57 = scmp.ne.s32.totalorder %s52, %s54
      %p58 = scmp.eq.s32.totalorder %s18, 0
      %p59 = por %p57, %p58
      %p60 = scmp.ne.s32.totalorder %s52, %s54
      %p61 = scmp.eq.s32.totalorder %s23, 1
      %p62 = por %p60, %p61
      %p63 = scmp.ne.s32.totalorder %s54, %s55
      %p64 = scmp.eq.s32.totalorder %s23, 0
      %p65 = por %p63, %p64
      %p66 = scmp.ne.s32.totalorder %s54, %s55
      %p67 = scmp.eq.s32.totalorder %s24, 1
      %p68 = por %p66, %p67
      %p70 = scmp.ne.s32.totalorder %s55, %s69
      %p71 = scmp.eq.s32.totalorder %s24, 0
      %p72 = por %p70, %p71
      %s74 = sadd.s32 %s73, 1
      %p77 = scmp.eq.s32.totalorder %s18, 1
      %p78 = scmp.ne.s32.totalorder %s73, %s75
      %p79 = scmp.eq.s32.totalorder %s18, 0
      %p80 = por %p78, %p79
      %p81 = scmp.ne.s32.totalorder %s73, %s75
      %p82 = scmp.eq.s32.totalorder %s23, 1
      %p83 = por %p81, %p82
      %p84 = scmp.ne.s32.totalorder %s75, %s76
      %p85 = scmp.eq.s32.totalorder %s23, 0
      %p86 = por %p84, %p85
      %p87 = scmp.ne.s32.totalorder %s75, %s76
      %p88 = scmp.eq.s32.totalorder %s24, 1
      %p89 = por %p87, %p88
      %p91 = scmp.ne.s32.totalorder %s76, %s90
      %p92 = scmp.eq.s32.totalorder %s24, 0
      %p93 = por %p91, %p92
      %s95 = sadd.s32 %s94, 1
      %p98 = scmp.eq.s32.totalorder %s18, 1
      %p99 = scmp.ne.s32.totalorder %s94, %s96
      %p100 = scmp.eq.s32.totalorder %s18, 0
      %p101 = por %p99, %p100
      %p102 = scmp.ne.s32.totalorder %s94, %s96
      %p103 = scmp.eq.s32.totalorder %s23, 1
      %p104 = por %p102, %p103
      %p105 = scmp.ne.s32.totalorder %s96, %s97
      %p106 = scmp.eq.s32.totalorder %s23, 0
      %p107 = por %p105, %p106
      %p108 = scmp.ne.s32.totalorder %s96, %s97
      %p109 = scmp.eq.s32.totalorder %s24, 1
      %p110 = por %p108, %p109
      %p112 = scmp.ne.s32.totalorder %s97, %s111
      %p113 = scmp.eq.s32.totalorder %s24, 0
      %p114 = por %p112, %p113
      %s116 = sadd.s32 %s115, 1
      %p119 = scmp.eq.s32.totalorder %s18, 1
      %p120 = scmp.ne.s32.totalorder %s115, %s117
      %p121 = scmp.eq.s32.totalorder %s18, 0
      %p122 = por %p120, %p121
      %p123 = scmp.ne.s32.totalorder %s115, %s117
      %p124 = scmp.eq.s32.totalorder %s23, 1
      %p125 = por %p123, %p124
      %p126 = scmp.ne.s32.totalorder %s117, %s118
      %p127 = scmp.eq.s32.totalorder %s23, 0
      %p128 = por %p126, %p127
      %p129 = scmp.ne.s32.totalorder %s117, %s118
      %p130 = scmp.eq.s32.totalorder %s24, 1
      %p131 = por %p129, %p130
      %p133 = scmp.ne.s32.totalorder %s118, %s132
      %p134 = scmp.eq.s32.totalorder %s24, 0
      %p135 = por %p133, %p134
      %s137 = sadd.s32 %s136, 1
      %p140 = scmp.eq.s32.totalorder %s18, 1
      %p141 = scmp.ne.s32.totalorder %s136, %s138
      %p142 = scmp.eq.s32.totalorder %s18, 0
      %p143 = por %p141, %p142
      %p144 = scmp.ne.s32.totalorder %s136, %s138
      %p145 = scmp.eq.s32.totalorder %s23, 1
      %p146 = por %p144, %p145
      %p147 = scmp.ne.s32.totalorder %s138, %s139
      %p148 = scmp.eq.s32.totalorder %s23, 0
      %p149 = por %p147, %p148
      %p150 = scmp.ne.s32.totalorder %s138, %s139
      %p151 = scmp.eq.s32.totalorder %s24, 1
      %p152 = por %p150, %p151
      %p154 = scmp.ne.s32.totalorder %s139, %s153
      %p155 = scmp.eq.s32.totalorder %s24, 0
      %p156 = por %p154, %p155
      %s158 = sadd.s32 %s157, 1
      %p161 = scmp.eq.s32.totalorder %s18, 1
      %p162 = scmp.ne.s32.totalorder %s157, %s159
      %p163 = scmp.eq.s32.totalorder %s18, 0
      %p164 = por %p162, %p163
      %p165 = scmp.ne.s32.totalorder %s157, %s159
      %p166 = scmp.eq.s32.totalorder %s23, 1
      %p167 = por %p165, %p166
      %p168 = scmp.ne.s32.totalorder %s159, %s160
      %p169 = scmp.eq.s32.totalorder %s23, 0
      %p170 = por %p168, %p169
      %p171 = scmp.ne.s32.totalorder %s159, %s160
      %p172 = scmp.eq.s32.totalorder %s24, 1
      %p173 = por %p171, %p172
      %p175 = scmp.ne.s32.totalorder %s160, %s174
      %p176 = scmp.eq.s32.totalorder %s24, 0
      %p177 = por %p175, %p176
      %s178 = ssub.s32 %s18, %s25
      %p179 = scmp.eq.s32.totalorder %s178, 0
      %s181 = sadd.s32 %s180, 1
      %s182 = scalar_select %p179, %s180, %s181
      %p185 = pneg %p179
      %p186 = scmp.eq.s32.totalorder %s18, 1
      %p187 = por %p185, %p186
      %p188 = scmp.ne.s32.totalorder %s180, %s183
      %p189 = scmp.eq.s32.totalorder %s18, 0
      %p190 = por %p188, %p189
      %p191 = scmp.ne.s32.totalorder %s180, %s183
      %p192 = scmp.eq.s32.totalorder %s23, 1
      %p193 = por %p191, %p192
      %p194 = scmp.ne.s32.totalorder %s183, %s184
      %p195 = scmp.eq.s32.totalorder %s23, 0
      %p196 = por %p194, %p195
      %p197 = scmp.ne.s32.totalorder %s183, %s184
      %p198 = scmp.eq.s32.totalorder %s24, 1
      %p199 = por %p197, %p198
      %p201 = scmp.ne.s32.totalorder %s184, %s200
      %p202 = scmp.eq.s32.totalorder %s24, 0
      %p203 = por %p201, %p202
      %p204 = scmp.le.s32.totalorder 1, %s18
      %p205 = scmp.lt.s32.totalorder %s18, 3
      %p206 = pnand %p204, %p205
      %p207 = pneg %p206
      // Predicated region
      $region9: #{tpu_custom_call.1} parent=5 // pred_check
        _
      $region10: #{tpu_custom_call.1} parent=5 // pred_check_branch
        %209 = sbr.rel (%p206) target = $region12
      $region11: #{tpu_custom_call.1} parent=5 // pred_region
        %s210 = ssub.s32 %s18, 1
        // Predicated region
        $region13: #{tpu_custom_call.1} parent=11 // pred_check
          %p211 = pneg %p65
        $region14: #{tpu_custom_call.1} parent=11 // pred_check_branch
          %213 = sbr.rel (%p211) target = $region16
        $region15: #{tpu_custom_call.1} parent=11 // pred_region
          _
        $region16: #{tpu_custom_call.1} parent=11 // pred_fallthru
          _
        // Predicated region
        $region17: #{tpu_custom_call.1} parent=11 // pred_check
          %p214 = pneg %p86
        $region18: #{tpu_custom_call.1} parent=11 // pred_check_branch
          %216 = sbr.rel (%p214) target = $region20
        $region19: #{tpu_custom_call.1} parent=11 // pred_region
          _
        $region20: #{tpu_custom_call.1} parent=11 // pred_fallthru
          _
        // Predicated region
        $region21: #{tpu_custom_call.1} parent=11 // pred_check
          %p217 = pneg %p107
        $region22: #{tpu_custom_call.1} parent=11 // pred_check_branch
          %219 = sbr.rel (%p217) target = $region24
        $region23: #{tpu_custom_call.1} parent=11 // pred_region
          _
        $region24: #{tpu_custom_call.1} parent=11 // pred_fallthru
          _
        // Predicated region
        $region25: #{tpu_custom_call.1} parent=11 // pred_check
          %p220 = pneg %p128
        $region26: #{tpu_custom_call.1} parent=11 // pred_check_branch
          %222 = sbr.rel (%p220) target = $region28
        $region27: #{tpu_custom_call.1} parent=11 // pred_region
          _
        $region28: #{tpu_custom_call.1} parent=11 // pred_fallthru
          _
        // Predicated region
        $region29: #{tpu_custom_call.1} parent=11 // pred_check
          %p223 = pneg %p149
        $region30: #{tpu_custom_call.1} parent=11 // pred_check_branch
          %225 = sbr.rel (%p223) target = $region32
        $region31: #{tpu_custom_call.1} parent=11 // pred_region
          _
        $region32: #{tpu_custom_call.1} parent=11 // pred_fallthru
          _
        // Predicated region
        $region33: #{tpu_custom_call.1} parent=11 // pred_check
          %p226 = pneg %p170
        $region34: #{tpu_custom_call.1} parent=11 // pred_check_branch
          %228 = sbr.rel (%p226) target = $region36
        $region35: #{tpu_custom_call.1} parent=11 // pred_region
          _
        $region36: #{tpu_custom_call.1} parent=11 // pred_fallthru
          _
      $region12: #{tpu_custom_call.1} parent=5 // pred_fallthru
        _
      %p229 = scmp.lt.s32.totalorder %s18, 2
      // Predicated region
      $region37: #{tpu_custom_call.1} parent=5 // pred_check
        %p230 = pneg %p229
      $region38: #{tpu_custom_call.1} parent=5 // pred_check_branch
        %232 = sbr.rel (%p230) target = $region40
      $region39: #{tpu_custom_call.1} parent=5 // pred_region
        // Predicated region
        $region41: #{tpu_custom_call.1} parent=39 // pred_check
          %p233 = pneg %p38
        $region42: #{tpu_custom_call.1} parent=39 // pred_check_branch
          %235 = sbr.rel (%p233) target = $region44
        $region43: #{tpu_custom_call.1} parent=39 // pred_region
          %s236 = smul.u32 32, %s18
          %s237 = ssub.s32 38, %s236
          %p238 = scmp.lt.s32.totalorder %s237, 32
          %s239 = scalar_select %p238, %s237, 32
          %s240 = smul.u32 128, %s239
          %p241 = scmp.lt.s32.totalorder %s236, 37
          %s242 = scalar_select %p241, %s236, 37
          %s243 = smul.addr %s242, 8
          %s244 = scalar_lea.vmem %s0, %s243
          %s245 = smul.u32 32, %s18
          %s246 = ssub.s32 38, %s245
          %p247 = scmp.lt.s32.totalorder %s246, 32
          %s248 = scalar_select %p247, %s246, 32
          %s249 = smul.u32 128, %s248
        $region44: #{tpu_custom_call.1} parent=39 // pred_fallthru
          _
      $region40: #{tpu_custom_call.1} parent=5 // pred_fallthru
        _
      %p250 = scmp.le.s32.totalorder 1, %s18
      %p251 = scmp.lt.s32.totalorder %s18, 3
      %p252 = pnand %p250, %p251
      %p253 = pneg %p252
      // Predicated region
      $region45: #{tpu_custom_call.1} parent=5 // pred_check
        _
      $region46: #{tpu_custom_call.1} parent=5 // pred_check_branch
        %255 = sbr.rel (%p252) target = $region48
      $region47: #{tpu_custom_call.1} parent=5 // pred_region
        %s256 = ssub.s32 %s18, 1
        %s257 = smul.u32 32, %s23
        %s258 = ssub.s32 38, %s257
        %p259 = scmp.lt.s32.totalorder %s258, 32
        %s260 = scalar_select %p259, %s258, 32
        %s261 = smul.u32 128, %s260
        %p262 = scmp.lt.s32.totalorder %s257, 37
        %s263 = scalar_select %p262, %s257, 37
        %s264 = smul.addr %s263, 8
        %s265 = scalar_lea.vmem %s0, %s264
        %p266 = pneg %p44
        %p267 = pneg %p41
        %p268 = pneg %p65
        %p269 = pneg %p62
        %p270 = pneg %p86
        %p271 = pneg %p83
        %p272 = pneg %p107
        %p273 = pneg %p104
        %p274 = pneg %p128
        %p275 = pneg %p125
        %p276 = pneg %p149
        %p277 = pneg %p146
        %p278 = pneg %p170
        %p279 = pneg %p167
        %p280 = pneg %p196
        %p281 = pneg %p193
        %s282 = sand.u32 %s183, 1
        %s283 = scalar_lea.sflag [#allocation4], %s282
        %s284 = sand.u32 %s183, 1
        %s285 = smul.addr %s284, 2
        %s286 = scalar_lea.vmem [#allocation3], %s285
        %s287 = smul.u32 32, %s23
        %s288 = ssub.s32 38, %s287
        %p289 = scmp.lt.s32.totalorder %s288, 32
        %s290 = scalar_select %p289, %s288, 32
        %s291 = smul.u32 128, %s290
        %p292 = scmp.lt.s32.totalorder %s287, 37
        %s293 = scalar_select %p292, %s287, 37
        %s294 = smul.addr %s293, 8
        %s295 = scalar_lea.vmem %s0, %s294
        %s296 = smul.u32 32, %s23
        %s297 = ssub.s32 38, %s296
        %p298 = scmp.lt.s32.totalorder %s297, 32
        %s299 = scalar_select %p298, %s297, 32
        %s300 = smul.u32 128, %s299
        %s301 = smul.u32 2, %s23
        %v303 = vld [vmem:[%s295] sm:$0xff]
        %v304 = vld [vmem:[%s295 + $0x8] sm:$0xff]
        %v305 = vld [vmem:[%s295 + $0x10] sm:$0xff]
        %v306 = vld [vmem:[%s295 + $0x18] sm:$0xff]
        %v307 = vld [vmem:[%s295 + $0x20] sm:$0xff]
        %v308 = vld [vmem:[%s295 + $0x28] sm:$0xff]
        %v309 = vld [vmem:[%s295 + $0x30] sm:$0xff]
        %v310 = vld [vmem:[%s295 + $0x38] sm:$0xff]
        %v311 = vld [vmem:[%s295 + $0x40] sm:$0xff]
        %v312 = vld [vmem:[%s295 + $0x48] sm:$0xff]
        %v313 = vld [vmem:[%s295 + $0x50] sm:$0xff]
        %v314 = vld [vmem:[%s295 + $0x58] sm:$0xff]
        %v315 = vld [vmem:[%s295 + $0x60] sm:$0xff]
        %v316 = vld [vmem:[%s295 + $0x68] sm:$0xff]
        %v317 = vld [vmem:[%s295 + $0x70] sm:$0xff]
        %v318 = vld [vmem:[%s295 + $0x78] sm:$0xff]
        %v319 = vld [vmem:[%s295 + $0x80] sm:$0xff]
        %v320 = vld [vmem:[%s295 + $0x88] sm:$0xff]
        %v321 = vld [vmem:[%s295 + $0x90] sm:$0xff]
        %v322 = vld [vmem:[%s295 + $0x98] sm:$0xff]
        %v323 = vld [vmem:[%s295 + $0xa0] sm:$0xff]
        %v324 = vld [vmem:[%s295 + $0xa8] sm:$0xff]
        %v325 = vld [vmem:[%s295 + $0xb0] sm:$0xff]
        %v326 = vld [vmem:[%s295 + $0xb8] sm:$0xff]
        %v327 = vld [vmem:[%s295 + $0xc0] sm:$0xff]
        %v328 = vld [vmem:[%s295 + $0xc8] sm:$0xff]
        %v329 = vld [vmem:[%s295 + $0xd0] sm:$0xff]
        %v330 = vld [vmem:[%s295 + $0xd8] sm:$0xff]
        %v331 = vld [vmem:[%s295 + $0xe0] sm:$0xff]
        %v332 = vld [vmem:[%s295 + $0xe8] sm:$0xff]
        %v333 = vld [vmem:[%s295 + $0xf0] sm:$0xff]
        %v334 = vld [vmem:[%s295 + $0xf8] sm:$0xff]
        %v335 = vpack.c.bf16 %v304, %v303
        %v336 = vpack.c.bf16 %v306, %v305
        %v337 = vpack.c.bf16 %v308, %v307
        %v338 = vpack.c.bf16 %v310, %v309
        %v339 = vpack.c.bf16 %v312, %v311
        %v340 = vpack.c.bf16 %v314, %v313
        %v341 = vpack.c.bf16 %v316, %v315
        %v342 = vpack.c.bf16 %v318, %v317
        %v343 = vpack.c.bf16 %v320, %v319
        %v344 = vpack.c.bf16 %v322, %v321
        %v345 = vpack.c.bf16 %v324, %v323
        %v346 = vpack.c.bf16 %v326, %v325
        %v347 = vpack.c.bf16 %v328, %v327
        %v348 = vpack.c.bf16 %v330, %v329
        %v349 = vpack.c.bf16 %v332, %v331
        %v350 = vpack.c.bf16 %v334, %v333
        %v351 = vld [vmem:[%s1] sm:$0xf]
        %v352 = vld [vmem:[%s1 + $0x4] sm:$0xf]
        %v353 = vld [vmem:[%s1 + $0x8] sm:$0xf]
        %v354 = vld [vmem:[%s1 + $0xc] sm:$0xf]
        %v355 = vld [vmem:[%s1 + $0x10] sm:$0xf]
        %v356 = vld [vmem:[%s1 + $0x14] sm:$0xf]
        %v357 = vld [vmem:[%s1 + $0x18] sm:$0xf]
        %v358 = vld [vmem:[%s1 + $0x1c] sm:$0xf]
        %v359 = vld [vmem:[%s2] sm:$0xff]
        %v360 = vld [vmem:[%s2 + $0x8] sm:$0xff]
        %v361 = vld [vmem:[%s2 + $0x10] sm:$0xff]
        %v362 = vld [vmem:[%s2 + $0x18] sm:$0xff]
        %v363 = vld [vmem:[%s2 + $0x20] sm:$0xff]
        %v364 = vld [vmem:[%s2 + $0x28] sm:$0xff]
        %v365 = vld [vmem:[%s2 + $0x30] sm:$0xff]
        %v366 = vld [vmem:[%s2 + $0x38] sm:$0xff]
        %368 = vset.pattern.permute.xlu0 0
        %369 = vperm.xlu0 %368, %v359
        %v370 = vpop.permute.xlu0 %369
        %373 = vset.pattern.permute.xlu0 0
        %374 = vperm.xlu0 %373, %v360
        %v375 = vpop.permute.xlu0 %374
        %378 = vset.pattern.permute.xlu0 0
        %379 = vperm.xlu0 %378, %v361
        %v380 = vpop.permute.xlu0 %379
        %383 = vset.pattern.permute.xlu0 0
        %384 = vperm.xlu0 %383, %v362
        %v385 = vpop.permute.xlu0 %384
        %388 = vset.pattern.permute.xlu0 0
        %389 = vperm.xlu0 %388, %v363
        %v390 = vpop.permute.xlu0 %389
        %393 = vset.pattern.permute.xlu0 0
        %394 = vperm.xlu0 %393, %v364
        %v395 = vpop.permute.xlu0 %394
        %398 = vset.pattern.permute.xlu0 0
        %399 = vperm.xlu0 %398, %v365
        %v400 = vpop.permute.xlu0 %399
        %403 = vset.pattern.permute.xlu0 0
        %404 = vperm.xlu0 %403, %v366
        %v405 = vpop.permute.xlu0 %404
        %v415 = vunpack.c.l.b16 %v351
        %v416 = vunpack.c.l.b16 %v352
        %v417 = vunpack.c.l.b16 %v353
        %v418 = vunpack.c.l.b16 %v354
        %v419 = vunpack.c.l.b16 %v355
        %v420 = vunpack.c.l.b16 %v356
        %v421 = vunpack.c.l.b16 %v357
        %v422 = vunpack.c.l.b16 %v358
        %v423 = vpack.c.b16 %v416, %v415
        %v424 = vpack.c.b16 %v418, %v417
        %v425 = vpack.c.b16 %v420, %v419
        %v426 = vpack.c.b16 %v422, %v421
        %vm427 = vcmask 261120
        %v429 = vsel %vm427, %v423, 0
        %v432 = vsel %vm427, %v424, 0
        %v435 = vsel %vm427, %v425, 0
        %v438 = vsel %vm427, %v426, 0
        %v441 = vsel %vm427, %v335, 0
        %v444 = vsel %vm427, %v336, 0
        %v447 = vsel %vm427, %v337, 0
        %v450 = vsel %vm427, %v338, 0
        %v453 = vsel %vm427, %v339, 0
        %v456 = vsel %vm427, %v340, 0
        %v459 = vsel %vm427, %v341, 0
        %v462 = vsel %vm427, %v342, 0
        %v465 = vsel %vm427, %v343, 0
        %v468 = vsel %vm427, %v344, 0
        %v471 = vsel %vm427, %v345, 0
        %v474 = vsel %vm427, %v346, 0
        %v477 = vsel %vm427, %v347, 0
        %v480 = vsel %vm427, %v348, 0
        %v483 = vsel %vm427, %v349, 0
        %v486 = vsel %vm427, %v350, 0
        %488 = vmatprep.subr.bf16.mxu0 0
        %489 = vmatpush1.bf16.xpose.msra.mxu0 %v441
        %490 = vmatprep.subr.bf16.mxu0 0
        %491 = vmatpush1.bf16.xpose.msra.mxu0 %v444
        %492 = vmatprep.subr.bf16.mxu0 0
        %493 = vmatpush1.bf16.xpose.msra.mxu0 %v447
        %494 = vmatprep.subr.bf16.mxu0 0
        %495 = vmatpush1.bf16.xpose.msra.mxu0 %v450
        %496 = vmatprep.subr.bf16.mxu0 0
        %497 = vmatpush1.bf16.xpose.msra.mxu0 %v453
        %498 = vmatprep.subr.bf16.mxu0 0
        %499 = vmatpush1.bf16.xpose.msra.mxu0 %v456
        %500 = vmatprep.subr.bf16.mxu0 0
        %501 = vmatpush1.bf16.xpose.msra.mxu0 %v459
        %502 = vmatprep.subr.bf16.mxu0 0
        %503 = vmatpush1.bf16.xpose.msra.mxu0 %v462
        %504 = vmatprep.subr.bf16.mxu0 0
        %505 = vmatpush1.bf16.xpose.msra.mxu0 %v465
        %506 = vmatprep.subr.bf16.mxu0 0
        %507 = vmatpush1.bf16.xpose.msra.mxu0 %v468
        %508 = vmatprep.subr.bf16.mxu0 0
        %509 = vmatpush1.bf16.xpose.msra.mxu0 %v471
        %510 = vmatprep.subr.bf16.mxu0 0
        %511 = vmatpush1.bf16.xpose.msra.mxu0 %v474
        %512 = vmatprep.subr.bf16.mxu0 0
        %513 = vmatpush1.bf16.xpose.msra.mxu0 %v477
        %514 = vmatprep.subr.bf16.mxu0 0
        %515 = vmatpush1.bf16.xpose.msra.mxu0 %v480
        %516 = vmatprep.subr.bf16.mxu0 0
        %517 = vmatpush1.bf16.xpose.msra.mxu0 %v483
        %518 = vmatprep.subr.bf16.mxu0 0
        %519 = vmatpush1.bf16.xpose.msra.mxu0 %v486
        %520 = vmatprep.mubr.bf16.mxu0 0
        %521 = vmatmul.mubr.bf16.gmra.mrb[0].mxu0 %v429
        %v522 = vpop.f32.mrb[0].mxu0
        %v523 = vadd.f32 %v370, %v522
        %v524 = vpop.f32.mrb[0].mxu0
        %v525 = vadd.f32 %v370, %v524
        %v526 = vpop.f32.mrb[0].mxu0
        %v527 = vadd.f32 %v375, %v526
        %v528 = vpop.f32.mrb[0].mxu0
        %v529 = vadd.f32 %v375, %v528
        %530 = vmatprep.mubr.bf16.mxu0 0
        %531 = vmatmul.mubr.bf16.gmra.mrb[0].mxu0 %v432
        %v532 = vpop.f32.mrb[0].mxu0
        %v533 = vadd.f32 %v380, %v532
        %v534 = vpop.f32.mrb[0].mxu0
        %v535 = vadd.f32 %v380, %v534
        %v536 = vpop.f32.mrb[0].mxu0
        %v537 = vadd.f32 %v385, %v536
        %v538 = vpop.f32.mrb[0].mxu0
        %v539 = vadd.f32 %v385, %v538
        %540 = vmatprep.mubr.bf16.mxu0 0
        %541 = vmatmul.mubr.bf16.gmra.mrb[0].mxu0 %v435
        %v542 = vpop.f32.mrb[0].mxu0
        %v543 = vadd.f32 %v390, %v542
        %v544 = vpop.f32.mrb[0].mxu0
        %v545 = vadd.f32 %v390, %v544
        %v546 = vpop.f32.mrb[0].mxu0
        %v547 = vadd.f32 %v395, %v546
        %v548 = vpop.f32.mrb[0].mxu0
        %v549 = vadd.f32 %v395, %v548
        %550 = vmatprep.mubr.bf16.mxu0 0
        %551 = vmatmul.mubr.bf16.gmra.mrb[0].mxu0 %v438
        %v552 = vpop.f32.mrb[0].mxu0
        %v553 = vadd.f32 %v400, %v552
        %v554 = vpop.f32.mrb[0].mxu0
        %v555 = vadd.f32 %v400, %v554
        %v556 = vpop.f32.mrb[0].mxu0
        %v557 = vadd.f32 %v405, %v556
        %v558 = vpop.f32.mrb[0].mxu0
        %v559 = vadd.f32 %v405, %v558
        %560 = vdwg.mxu0
        %v561 = vmax.f32 %v523, 0.0
        %v562 = vmax.f32 %v525, 0.0
        %v563 = vmax.f32 %v527, 0.0
        %v564 = vmax.f32 %v529, 0.0
        %v565 = vmax.f32 %v533, 0.0
        %v566 = vmax.f32 %v535, 0.0
        %v567 = vmax.f32 %v537, 0.0
        %v568 = vmax.f32 %v539, 0.0
        %v569 = vmax.f32 %v543, 0.0
        %v570 = vmax.f32 %v545, 0.0
        %v571 = vmax.f32 %v547, 0.0
        %v572 = vmax.f32 %v549, 0.0
        %v573 = vmax.f32 %v553, 0.0
        %v574 = vmax.f32 %v555, 0.0
        %v575 = vmax.f32 %v557, 0.0
        %v576 = vmax.f32 %v559, 0.0
        %v577 = vld [vmem:[%s3] sm:$0xf]
        %v578 = vld [vmem:[%s3 + $0x4] sm:$0xf]
        %v579 = vld [vmem:[%s3 + $0x8] sm:$0xf]
        %v580 = vld [vmem:[%s3 + $0xc] sm:$0xf]
        %v581 = vld [vmem:[%s3 + $0x10] sm:$0xf]
        %v582 = vld [vmem:[%s3 + $0x14] sm:$0xf]
        %v583 = vld [vmem:[%s3 + $0x18] sm:$0xf]
        %v584 = vld [vmem:[%s3 + $0x1c] sm:$0xf]
        %v585 = vpack.c.bf16 %v563, %v561
        %v586 = vpack.c.bf16 %v564, %v562
        %v587 = vpack.c.bf16 %v567, %v565
        %v588 = vpack.c.bf16 %v568, %v566
        %v589 = vpack.c.bf16 %v571, %v569
        %v590 = vpack.c.bf16 %v572, %v570
        %v591 = vpack.c.bf16 %v575, %v573
        %v592 = vpack.c.bf16 %v576, %v574
        %v593 = vld [vmem:[%s4] sm:$0xff]
        %v594 = vld [vmem:[%s4 + $0x8] sm:$0xff]
        %v595 = vld [vmem:[%s4 + $0x10] sm:$0xff]
        %v596 = vld [vmem:[%s4 + $0x18] sm:$0xff]
        %v597 = vld [vmem:[%s4 + $0x20] sm:$0xff]
        %v598 = vld [vmem:[%s4 + $0x28] sm:$0xff]
        %v599 = vld [vmem:[%s4 + $0x30] sm:$0xff]
        %v600 = vld [vmem:[%s4 + $0x38] sm:$0xff]
        %602 = vset.pattern.permute.xlu0 0
        %603 = vperm.xlu0 %602, %v593
        %v604 = vpop.permute.xlu0 %603
        %607 = vset.pattern.permute.xlu0 0
        %608 = vperm.xlu0 %607, %v594
        %v609 = vpop.permute.xlu0 %608
        %612 = vset.pattern.permute.xlu0 0
        %613 = vperm.xlu0 %612, %v595
        %v614 = vpop.permute.xlu0 %613
        %617 = vset.pattern.permute.xlu0 0
        %618 = vperm.xlu0 %617, %v596
        %v619 = vpop.permute.xlu0 %618
        %622 = vset.pattern.permute.xlu0 0
        %623 = vperm.xlu0 %622, %v597
        %v624 = vpop.permute.xlu0 %623
        %627 = vset.pattern.permute.xlu0 0
        %628 = vperm.xlu0 %627, %v598
        %v629 = vpop.permute.xlu0 %628
        %632 = vset.pattern.permute.xlu0 0
        %633 = vperm.xlu0 %632, %v599
        %v634 = vpop.permute.xlu0 %633
        %637 = vset.pattern.permute.xlu0 0
        %638 = vperm.xlu0 %637, %v600
        %v639 = vpop.permute.xlu0 %638
        %v649 = vunpack.c.l.b16 %v577
        %v650 = vunpack.c.l.b16 %v578
        %v651 = vunpack.c.l.b16 %v579
        %v652 = vunpack.c.l.b16 %v580
        %v653 = vunpack.c.l.b16 %v581
        %v654 = vunpack.c.l.b16 %v582
        %v655 = vunpack.c.l.b16 %v583
        %v656 = vunpack.c.l.b16 %v584
        %v657 = vpack.c.b16 %v650, %v649
        %v658 = vpack.c.b16 %v652, %v651
        %v659 = vpack.c.b16 %v654, %v653
        %v660 = vpack.c.b16 %v656, %v655
        %vm661 = vcmask 523264
        %v663 = vsel %vm661, %v657, 0
        %v666 = vsel %vm661, %v658, 0
        %v669 = vsel %vm661, %v659, 0
        %v672 = vsel %vm661, %v660, 0
        %674 = vmatprep.subr.bf16.mxu0 %v586
        %675 = vmatpush1.bf16.msra.mxu0 %v585
        %676 = vmatprep.subr.bf16.mxu0 %v588
        %677 = vmatpush1.bf16.msra.mxu0 %v587
        %678 = vmatprep.subr.bf16.mxu0 %v590
        %679 = vmatpush1.bf16.msra.mxu0 %v589
        %680 = vmatprep.subr.bf16.mxu0 %v592
        %681 = vmatpush1.bf16.msra.mxu0 %v591
        %682 = vmatprep.subr.bf16.mxu0 0
        %683 = vmatpush1.bf16.msra.mxu0 0
        %684 = vmatprep.subr.bf16.mxu0 0
        %685 = vmatpush1.bf16.msra.mxu0 0
        %686 = vmatprep.subr.bf16.mxu0 0
        %687 = vmatpush1.bf16.msra.mxu0 0
        %688 = vmatprep.subr.bf16.mxu0 0
        %689 = vmatpush1.bf16.msra.mxu0 0
        %690 = vmatprep.subr.bf16.mxu0 0
        %691 = vmatpush1.bf16.msra.mxu0 0
        %692 = vmatprep.subr.bf16.mxu0 0
        %693 = vmatpush1.bf16.msra.mxu0 0
        %694 = vmatprep.subr.bf16.mxu0 0
        %695 = vmatpush1.bf16.msra.mxu0 0
        %696 = vmatprep.subr.bf16.mxu0 0
        %697 = vmatpush1.bf16.msra.mxu0 0
        %698 = vmatprep.subr.bf16.mxu0 0
        %699 = vmatpush1.bf16.msra.mxu0 0
        %700 = vmatprep.subr.bf16.mxu0 0
        %701 = vmatpush1.bf16.msra.mxu0 0
        %702 = vmatprep.subr.bf16.mxu0 0
        %703 = vmatpush1.bf16.msra.mxu0 0
        %704 = vmatprep.subr.bf16.mxu0 0
        %705 = vmatpush1.bf16.msra.mxu0 0
        %706 = vmatprep.mubr.bf16.mxu0 0
        %707 = vmatmul.mubr.bf16.gmra.mrb[0].mxu0 %v663
        %v708 = vpop.f32.mrb[0].mxu0
        %v709 = vadd.f32 %v604, %v708
        %v710 = vpop.f32.mrb[0].mxu0
        %v711 = vadd.f32 %v604, %v710
        %v712 = vpop.f32.mrb[0].mxu0
        %v713 = vadd.f32 %v609, %v712
        %v714 = vpop.f32.mrb[0].mxu0
        %v715 = vadd.f32 %v609, %v714
        %716 = vmatprep.mubr.bf16.mxu0 0
        %717 = vmatmul.mubr.bf16.gmra.mrb[0].mxu0 %v666
        %v718 = vpop.f32.mrb[0].mxu0
        %v719 = vadd.f32 %v614, %v718
        %v720 = vpop.f32.mrb[0].mxu0
        %v721 = vadd.f32 %v614, %v720
        %v722 = vpop.f32.mrb[0].mxu0
        %v723 = vadd.f32 %v619, %v722
        %v724 = vpop.f32.mrb[0].mxu0
        %v725 = vadd.f32 %v619, %v724
        %726 = vmatprep.mubr.bf16.mxu0 0
        %727 = vmatmul.mubr.bf16.gmra.mrb[0].mxu0 %v669
        %v728 = vpop.f32.mrb[0].mxu0
        %v729 = vadd.f32 %v624, %v728
        %v730 = vpop.f32.mrb[0].mxu0
        %v731 = vadd.f32 %v624, %v730
        %v732 = vpop.f32.mrb[0].mxu0
        %v733 = vadd.f32 %v629, %v732
        %v734 = vpop.f32.mrb[0].mxu0
        %v735 = vadd.f32 %v629, %v734
        %736 = vmatprep.mubr.bf16.mxu0 0
        %737 = vmatmul.mubr.bf16.gmra.mrb[0].mxu0 %v672
        %v738 = vpop.f32.mrb[0].mxu0
        %v739 = vadd.f32 %v634, %v738
        %v740 = vpop.f32.mrb[0].mxu0
        %v741 = vadd.f32 %v634, %v740
        %v742 = vpop.f32.mrb[0].mxu0
        %v743 = vadd.f32 %v639, %v742
        %v744 = vpop.f32.mrb[0].mxu0
        %v745 = vadd.f32 %v639, %v744
        %746 = vdwg.mxu0
        %v747 = vmax.f32 %v709, 0.0
        %v748 = vmax.f32 %v711, 0.0
        %v749 = vmax.f32 %v713, 0.0
        %v750 = vmax.f32 %v715, 0.0
        %v751 = vmax.f32 %v719, 0.0
        %v752 = vmax.f32 %v721, 0.0
        %v753 = vmax.f32 %v723, 0.0
        %v754 = vmax.f32 %v725, 0.0
        %v755 = vmax.f32 %v729, 0.0
        %v756 = vmax.f32 %v731, 0.0
        %v757 = vmax.f32 %v733, 0.0
        %v758 = vmax.f32 %v735, 0.0
        %v759 = vmax.f32 %v739, 0.0
        %v760 = vmax.f32 %v741, 0.0
        %v761 = vmax.f32 %v743, 0.0
        %v762 = vmax.f32 %v745, 0.0
        %s763 = scalar_lea.vmem %s3, 32
        %v764 = vld [vmem:[%s763] sm:$0xf]
        %v765 = vld [vmem:[%s763 + $0x4] sm:$0xf]
        %v766 = vld [vmem:[%s763 + $0x8] sm:$0xf]
        %v767 = vld [vmem:[%s763 + $0xc] sm:$0xf]
        %v768 = vld [vmem:[%s763 + $0x10] sm:$0xf]
        %v769 = vld [vmem:[%s763 + $0x14] sm:$0xf]
        %v770 = vld [vmem:[%s763 + $0x18] sm:$0xf]
        %v771 = vld [vmem:[%s763 + $0x1c] sm:$0xf]
        %v772 = vpack.c.bf16 %v749, %v747
        %v773 = vpack.c.bf16 %v750, %v748
        %v774 = vpack.c.bf16 %v753, %v751
        %v775 = vpack.c.bf16 %v754, %v752
        %v776 = vpack.c.bf16 %v757, %v755
        %v777 = vpack.c.bf16 %v758, %v756
        %v778 = vpack.c.bf16 %v761, %v759
        %v779 = vpack.c.bf16 %v762, %v760
        %s780 = scalar_lea.vmem %s4, 64
        %v781 = vld [vmem:[%s780] sm:$0xff]
        %v782 = vld [vmem:[%s780 + $0x8] sm:$0xff]
        %v783 = vld [vmem:[%s780 + $0x10] sm:$0xff]
        %v784 = vld [vmem:[%s780 + $0x18] sm:$0xff]
        %v785 = vld [vmem:[%s780 + $0x20] sm:$0xff]
        %v786 = vld [vmem:[%s780 + $0x28] sm:$0xff]
        %v787 = vld [vmem:[%s780 + $0x30] sm:$0xff]
        %v788 = vld [vmem:[%s780 + $0x38] sm:$0xff]
        %790 = vset.pattern.permute.xlu0 0
        %791 = vperm.xlu0 %790, %v781
        %v792 = vpop.permute.xlu0 %791
        %795 = vset.pattern.permute.xlu0 0
        %796 = vperm.xlu0 %795, %v782
        %v797 = vpop.permute.xlu0 %796
        %800 = vset.pattern.permute.xlu0 0
        %801 = vperm.xlu0 %800, %v783
        %v802 = vpop.permute.xlu0 %801
        %805 = vset.pattern.permute.xlu0 0
        %806 = vperm.xlu0 %805, %v784
        %v807 = vpop.permute.xlu0 %806
        %810 = vset.pattern.permute.xlu0 0
        %811 = vperm.xlu0 %810, %v785
        %v812 = vpop.permute.xlu0 %811
        %815 = vset.pattern.permute.xlu0 0
        %816 = vperm.xlu0 %815, %v786
        %v817 = vpop.permute.xlu0 %816
        %820 = vset.pattern.permute.xlu0 0
        %821 = vperm.xlu0 %820, %v787
        %v822 = vpop.permute.xlu0 %821
        %825 = vset.pattern.permute.xlu0 0
        %826 = vperm.xlu0 %825, %v788
        %v827 = vpop.permute.xlu0 %826
        %v837 = vunpack.c.l.b16 %v764
        %v838 = vunpack.c.l.b16 %v765
        %v839 = vunpack.c.l.b16 %v766
        %v840 = vunpack.c.l.b16 %v767
        %v841 = vunpack.c.l.b16 %v768
        %v842 = vunpack.c.l.b16 %v769
        %v843 = vunpack.c.l.b16 %v770
        %v844 = vunpack.c.l.b16 %v771
        %v845 = vpack.c.b16 %v838, %v837
        %v846 = vpack.c.b16 %v840, %v839
        %v847 = vpack.c.b16 %v842, %v841
        %v848 = vpack.c.b16 %v844, %v843
        %v850 = vsel %vm661, %v845, 0
        %v853 = vsel %vm661, %v846, 0
        %v856 = vsel %vm661, %v847, 0
        %v859 = vsel %vm661, %v848, 0
        %861 = vmatprep.subr.bf16.mxu0 %v773
        %862 = vmatpush1.bf16.msra.mxu0 %v772
        %863 = vmatprep.subr.bf16.mxu0 %v775
        %864 = vmatpush1.bf16.msra.mxu0 %v774
        %865 = vmatprep.subr.bf16.mxu0 %v777
        %866 = vmatpush1.bf16.msra.mxu0 %v776
        %867 = vmatprep.subr.bf16.mxu0 %v779
        %868 = vmatpush1.bf16.msra.mxu0 %v778
        %869 = vmatprep.subr.bf16.mxu0 0
        %870 = vmatpush1.bf16.msra.mxu0 0
        %871 = vmatprep.subr.bf16.mxu0 0
        %872 = vmatpush1.bf16.msra.mxu0 0
        %873 = vmatprep.subr.bf16.mxu0 0
        %874 = vmatpush1.bf16.msra.mxu0 0
        %875 = vmatprep.subr.bf16.mxu0 0
        %876 = vmatpush1.bf16.msra.mxu0 0
        %877 = vmatprep.subr.bf16.mxu0 0
        %878 = vmatpush1.bf16.msra.mxu0 0
        %879 = vmatprep.subr.bf16.mxu0 0
        %880 = vmatpush1.bf16.msra.mxu0 0
        %881 = vmatprep.subr.bf16.mxu0 0
        %882 = vmatpush1.bf16.msra.mxu0 0
        %883 = vmatprep.subr.bf16.mxu0 0
        %884 = vmatpush1.bf16.msra.mxu0 0
        %885 = vmatprep.subr.bf16.mxu0 0
        %886 = vmatpush1.bf16.msra.mxu0 0
        %887 = vmatprep.subr.bf16.mxu0 0
        %888 = vmatpush1.bf16.msra.mxu0 0
        %889 = vmatprep.subr.bf16.mxu0 0
        %890 = vmatpush1.bf16.msra.mxu0 0
        %891 = vmatprep.subr.bf16.mxu0 0
        %892 = vmatpush1.bf16.msra.mxu0 0
        %893 = vmatprep.mubr.bf16.mxu0 0
        %894 = vmatmul.mubr.bf16.gmra.mrb[0].mxu0 %v850
        %v895 = vpop.f32.mrb[0].mxu0
        %v896 = vadd.f32 %v792, %v895
        %v897 = vpop.f32.mrb[0].mxu0
        %v898 = vadd.f32 %v792, %v897
        %v899 = vpop.f32.mrb[0].mxu0
        %v900 = vadd.f32 %v797, %v899
        %v901 = vpop.f32.mrb[0].mxu0
        %v902 = vadd.f32 %v797, %v901
        %903 = vmatprep.mubr.bf16.mxu0 0
        %904 = vmatmul.mubr.bf16.gmra.mrb[0].mxu0 %v853
        %v905 = vpop.f32.mrb[0].mxu0
        %v906 = vadd.f32 %v802, %v905
        %v907 = vpop.f32.mrb[0].mxu0
        %v908 = vadd.f32 %v802, %v907
        %v909 = vpop.f32.mrb[0].mxu0
        %v910 = vadd.f32 %v807, %v909
        %v911 = vpop.f32.mrb[0].mxu0
        %v912 = vadd.f32 %v807, %v911
        %913 = vmatprep.mubr.bf16.mxu0 0
        %914 = vmatmul.mubr.bf16.gmra.mrb[0].mxu0 %v856
        %v915 = vpop.f32.mrb[0].mxu0
        %v916 = vadd.f32 %v812, %v915
        %v917 = vpop.f32.mrb[0].mxu0
        %v918 = vadd.f32 %v812, %v917
        %v919 = vpop.f32.mrb[0].mxu0
        %v920 = vadd.f32 %v817, %v919
        %v921 = vpop.f32.mrb[0].mxu0
        %v922 = vadd.f32 %v817, %v921
        %923 = vmatprep.mubr.bf16.mxu0 0
        %924 = vmatmul.mubr.bf16.gmra.mrb[0].mxu0 %v859
        %v925 = vpop.f32.mrb[0].mxu0
        %v926 = vadd.f32 %v822, %v925
        %v927 = vpop.f32.mrb[0].mxu0
        %v928 = vadd.f32 %v822, %v927
        %v929 = vpop.f32.mrb[0].mxu0
        %v930 = vadd.f32 %v827, %v929
        %v931 = vpop.f32.mrb[0].mxu0
        %v932 = vadd.f32 %v827, %v931
        %933 = vdwg.mxu0
        %v934 = vmax.f32 %v896, 0.0
        %v935 = vmax.f32 %v898, 0.0
        %v936 = vmax.f32 %v900, 0.0
        %v937 = vmax.f32 %v902, 0.0
        %v938 = vmax.f32 %v906, 0.0
        %v939 = vmax.f32 %v908, 0.0
        %v940 = vmax.f32 %v910, 0.0
        %v941 = vmax.f32 %v912, 0.0
        %v942 = vmax.f32 %v916, 0.0
        %v943 = vmax.f32 %v918, 0.0
        %v944 = vmax.f32 %v920, 0.0
        %v945 = vmax.f32 %v922, 0.0
        %v946 = vmax.f32 %v926, 0.0
        %v947 = vmax.f32 %v928, 0.0
        %v948 = vmax.f32 %v930, 0.0
        %v949 = vmax.f32 %v932, 0.0
        %s950 = scalar_lea.vmem %s3, 64
        %v951 = vld [vmem:[%s950] sm:$0xf]
        %v952 = vld [vmem:[%s950 + $0x4] sm:$0xf]
        %v953 = vld [vmem:[%s950 + $0x8] sm:$0xf]
        %v954 = vld [vmem:[%s950 + $0xc] sm:$0xf]
        %v955 = vld [vmem:[%s950 + $0x10] sm:$0xf]
        %v956 = vld [vmem:[%s950 + $0x14] sm:$0xf]
        %v957 = vld [vmem:[%s950 + $0x18] sm:$0xf]
        %v958 = vld [vmem:[%s950 + $0x1c] sm:$0xf]
        %v959 = vpack.c.bf16 %v936, %v934
        %v960 = vpack.c.bf16 %v937, %v935
        %v961 = vpack.c.bf16 %v940, %v938
        %v962 = vpack.c.bf16 %v941, %v939
        %v963 = vpack.c.bf16 %v944, %v942
        %v964 = vpack.c.bf16 %v945, %v943
        %v965 = vpack.c.bf16 %v948, %v946
        %v966 = vpack.c.bf16 %v949, %v947
        %s967 = scalar_lea.vmem %s4, 128
        %v968 = vld [vmem:[%s967] sm:$0xff]
        %v969 = vld [vmem:[%s967 + $0x8] sm:$0xff]
        %v970 = vld [vmem:[%s967 + $0x10] sm:$0xff]
        %v971 = vld [vmem:[%s967 + $0x18] sm:$0xff]
        %v972 = vld [vmem:[%s967 + $0x20] sm:$0xff]
        %v973 = vld [vmem:[%s967 + $0x28] sm:$0xff]
        %v974 = vld [vmem:[%s967 + $0x30] sm:$0xff]
        %v975 = vld [vmem:[%s967 + $0x38] sm:$0xff]
        %977 = vset.pattern.permute.xlu0 0
        %978 = vperm.xlu0 %977, %v968
        %v979 = vpop.permute.xlu0 %978
        %982 = vset.pattern.permute.xlu0 0
        %983 = vperm.xlu0 %982, %v969
        %v984 = vpop.permute.xlu0 %983
        %987 = vset.pattern.permute.xlu0 0
        %988 = vperm.xlu0 %987, %v970
        %v989 = vpop.permute.xlu0 %988
        %992 = vset.pattern.permute.xlu0 0
        %993 = vperm.xlu0 %992, %v971
        %v994 = vpop.permute.xlu0 %993
        %997 = vset.pattern.permute.xlu0 0
        %998 = vperm.xlu0 %997, %v972
        %v999 = vpop.permute.xlu0 %998
        %1002 = vset.pattern.permute.xlu0 0
        %1003 = vperm.xlu0 %1002, %v973
        %v1004 = vpop.permute.xlu0 %1003
        %1007 = vset.pattern.permute.xlu0 0
        %1008 = vperm.xlu0 %1007, %v974
        %v1009 = vpop.permute.xlu0 %1008
        %1012 = vset.pattern.permute.xlu0 0
        %1013 = vperm.xlu0 %1012, %v975
        %v1014 = vpop.permute.xlu0 %1013
        %v1024 = vunpack.c.l.b16 %v951
        %v1025 = vunpack.c.l.b16 %v952
        %v1026 = vunpack.c.l.b16 %v953
        %v1027 = vunpack.c.l.b16 %v954
        %v1028 = vunpack.c.l.b16 %v955
        %v1029 = vunpack.c.l.b16 %v956
        %v1030 = vunpack.c.l.b16 %v957
        %v1031 = vunpack.c.l.b16 %v958
        %v1032 = vpack.c.b16 %v1025, %v1024
        %v1033 = vpack.c.b16 %v1027, %v1026
        %v1034 = vpack.c.b16 %v1029, %v1028
        %v1035 = vpack.c.b16 %v1031, %v1030
        %v1037 = vsel %vm661, %v1032, 0
        %v1040 = vsel %vm661, %v1033, 0
        %v1043 = vsel %vm661, %v1034, 0
        %v1046 = vsel %vm661, %v1035, 0
        %1048 = vmatprep.subr.bf16.mxu0 %v960
        %1049 = vmatpush1.bf16.msra.mxu0 %v959
        %1050 = vmatprep.subr.bf16.mxu0 %v962
        %1051 = vmatpush1.bf16.msra.mxu0 %v961
        %1052 = vmatprep.subr.bf16.mxu0 %v964
        %1053 = vmatpush1.bf16.msra.mxu0 %v963
        %1054 = vmatprep.subr.bf16.mxu0 %v966
        %1055 = vmatpush1.bf16.msra.mxu0 %v965
        %1056 = vmatprep.subr.bf16.mxu0 0
        %1057 = vmatpush1.bf16.msra.mxu0 0
        %1058 = vmatprep.subr.bf16.mxu0 0
        %1059 = vmatpush1.bf16.msra.mxu0 0
        %1060 = vmatprep.subr.bf16.mxu0 0
        %1061 = vmatpush1.bf16.msra.mxu0 0
        %1062 = vmatprep.subr.bf16.mxu0 0
        %1063 = vmatpush1.bf16.msra.mxu0 0
        %1064 = vmatprep.subr.bf16.mxu0 0
        %1065 = vmatpush1.bf16.msra.mxu0 0
        %1066 = vmatprep.subr.bf16.mxu0 0
        %1067 = vmatpush1.bf16.msra.mxu0 0
        %1068 = vmatprep.subr.bf16.mxu0 0
        %1069 = vmatpush1.bf16.msra.mxu0 0
        %1070 = vmatprep.subr.bf16.mxu0 0
        %1071 = vmatpush1.bf16.msra.mxu0 0
        %1072 = vmatprep.subr.bf16.mxu0 0
        %1073 = vmatpush1.bf16.msra.mxu0 0
        %1074 = vmatprep.subr.bf16.mxu0 0
        %1075 = vmatpush1.bf16.msra.mxu0 0
        %1076 = vmatprep.subr.bf16.mxu0 0
        %1077 = vmatpush1.bf16.msra.mxu0 0
        %1078 = vmatprep.subr.bf16.mxu0 0
        %1079 = vmatpush1.bf16.msra.mxu0 0
        %1080 = vmatprep.mubr.bf16.mxu0 0
        %1081 = vmatmul.mubr.bf16.gmra.mrb[0].mxu0 %v1037
        %v1082 = vpop.f32.mrb[0].mxu0
        %v1083 = vadd.f32 %v979, %v1082
        %v1084 = vpop.f32.mrb[0].mxu0
        %v1085 = vadd.f32 %v979, %v1084
        %v1086 = vpop.f32.mrb[0].mxu0
        %v1087 = vadd.f32 %v984, %v1086
        %v1088 = vpop.f32.mrb[0].mxu0
        %v1089 = vadd.f32 %v984, %v1088
        %1090 = vmatprep.mubr.bf16.mxu0 0
        %1091 = vmatmul.mubr.bf16.gmra.mrb[0].mxu0 %v1040
        %v1092 = vpop.f32.mrb[0].mxu0
        %v1093 = vadd.f32 %v989, %v1092
        %v1094 = vpop.f32.mrb[0].mxu0
        %v1095 = vadd.f32 %v989, %v1094
        %v1096 = vpop.f32.mrb[0].mxu0
        %v1097 = vadd.f32 %v994, %v1096
        %v1098 = vpop.f32.mrb[0].mxu0
        %v1099 = vadd.f32 %v994, %v1098
        %1100 = vmatprep.mubr.bf16.mxu0 0
        %1101 = vmatmul.mubr.bf16.gmra.mrb[0].mxu0 %v1043
        %v1102 = vpop.f32.mrb[0].mxu0
        %v1103 = vadd.f32 %v999, %v1102
        %v1104 = vpop.f32.mrb[0].mxu0
        %v1105 = vadd.f32 %v999, %v1104
        %v1106 = vpop.f32.mrb[0].mxu0
        %v1107 = vadd.f32 %v1004, %v1106
        %v1108 = vpop.f32.mrb[0].mxu0
        %v1109 = vadd.f32 %v1004, %v1108
        %1110 = vmatprep.mubr.bf16.mxu0 0
        %1111 = vmatmul.mubr.bf16.gmra.mrb[0].mxu0 %v1046
        %v1112 = vpop.f32.mrb[0].mxu0
        %v1113 = vadd.f32 %v1009, %v1112
        %v1114 = vpop.f32.mrb[0].mxu0
        %v1115 = vadd.f32 %v1009, %v1114
        %v1116 = vpop.f32.mrb[0].mxu0
        %v1117 = vadd.f32 %v1014, %v1116
        %v1118 = vpop.f32.mrb[0].mxu0
        %v1119 = vadd.f32 %v1014, %v1118
        %1120 = vdwg.mxu0
        %v1121 = vmax.f32 %v1083, 0.0
        %v1122 = vmax.f32 %v1085, 0.0
        %v1123 = vmax.f32 %v1087, 0.0
        %v1124 = vmax.f32 %v1089, 0.0
        %v1125 = vmax.f32 %v1093, 0.0
        %v1126 = vmax.f32 %v1095, 0.0
        %v1127 = vmax.f32 %v1097, 0.0
        %v1128 = vmax.f32 %v1099, 0.0
        %v1129 = vmax.f32 %v1103, 0.0
        %v1130 = vmax.f32 %v1105, 0.0
        %v1131 = vmax.f32 %v1107, 0.0
        %v1132 = vmax.f32 %v1109, 0.0
        %v1133 = vmax.f32 %v1113, 0.0
        %v1134 = vmax.f32 %v1115, 0.0
        %v1135 = vmax.f32 %v1117, 0.0
        %v1136 = vmax.f32 %v1119, 0.0
        %v1137 = vld [vmem:[%s5] sm:$0xff]
        %v1138 = vld [vmem:[%s5 + $0x8] sm:$0xff]
        %v1139 = vld [vmem:[%s5 + $0x10] sm:$0xff]
        %v1140 = vld [vmem:[%s5 + $0x18] sm:$0xff]
        %v1141 = vld [vmem:[%s5 + $0x20] sm:$0xff]
        %v1142 = vld [vmem:[%s5 + $0x28] sm:$0xff]
        %v1143 = vld [vmem:[%s5 + $0x30] sm:$0xff]
        %v1144 = vld [vmem:[%s5 + $0x38] sm:$0xff]
        %1146 = vset.pattern.permute.xlu0 0
        %1147 = vperm.xlu0 %1146, %v1137
        %v1148 = vpop.permute.xlu0 %1147
        %1151 = vset.pattern.permute.xlu0 0
        %1152 = vperm.xlu0 %1151, %v1138
        %v1153 = vpop.permute.xlu0 %1152
        %1156 = vset.pattern.permute.xlu0 0
        %1157 = vperm.xlu0 %1156, %v1139
        %v1158 = vpop.permute.xlu0 %1157
        %1161 = vset.pattern.permute.xlu0 0
        %1162 = vperm.xlu0 %1161, %v1140
        %v1163 = vpop.permute.xlu0 %1162
        %1166 = vset.pattern.permute.xlu0 0
        %1167 = vperm.xlu0 %1166, %v1141
        %v1168 = vpop.permute.xlu0 %1167
        %1171 = vset.pattern.permute.xlu0 0
        %1172 = vperm.xlu0 %1171, %v1142
        %v1173 = vpop.permute.xlu0 %1172
        %1176 = vset.pattern.permute.xlu0 0
        %1177 = vperm.xlu0 %1176, %v1143
        %v1178 = vpop.permute.xlu0 %1177
        %1181 = vset.pattern.permute.xlu0 0
        %1182 = vperm.xlu0 %1181, %v1144
        %v1183 = vpop.permute.xlu0 %1182
        %v1185 = vmul.f32 %v1121, %v1148
        %v1186 = vmul.f32 %v1122, %v1148
        %v1187 = vmul.f32 %v1123, %v1153
        %v1188 = vmul.f32 %v1124, %v1153
        %v1189 = vmul.f32 %v1125, %v1158
        %v1190 = vmul.f32 %v1126, %v1158
        %v1191 = vmul.f32 %v1127, %v1163
        %v1192 = vmul.f32 %v1128, %v1163
        %v1193 = vmul.f32 %v1129, %v1168
        %v1194 = vmul.f32 %v1130, %v1168
        %v1195 = vmul.f32 %v1131, %v1173
        %v1196 = vmul.f32 %v1132, %v1173
        %v1197 = vmul.f32 %v1133, %v1178
        %v1198 = vmul.f32 %v1134, %v1178
        %v1199 = vmul.f32 %v1135, %v1183
        %v1200 = vmul.f32 %v1136, %v1183
        %v1201 = vadd.f32 %v1185, %v1187
        %v1202 = vadd.f32 %v1201, %v1189
        %v1203 = vadd.f32 %v1202, %v1191
        %v1204 = vadd.f32 %v1203, %v1193
        %v1205 = vadd.f32 %v1204, %v1195
        %v1206 = vadd.f32 %v1205, %v1197
        %v1207 = vadd.f32 %v1206, %v1199
        %v1208 = vrot.slane %v1207, 4
        %v1209 = vadd.f32 %v1207, %v1208
        %v1210 = vrot.slane %v1209, 2
        %v1211 = vadd.f32 %v1209, %v1210
        %v1212 = vrot.slane %v1211, 1
        %v1213 = vadd.f32 %v1211, %v1212
        %v1214 = vadd.f32 %v1186, %v1188
        %v1215 = vadd.f32 %v1214, %v1190
        %v1216 = vadd.f32 %v1215, %v1192
        %v1217 = vadd.f32 %v1216, %v1194
        %v1218 = vadd.f32 %v1217, %v1196
        %v1219 = vadd.f32 %v1218, %v1198
        %v1220 = vadd.f32 %v1219, %v1200
        %v1221 = vrot.slane %v1220, 4
        %v1222 = vadd.f32 %v1220, %v1221
        %v1223 = vrot.slane %v1222, 2
        %v1224 = vadd.f32 %v1222, %v1223
        %v1225 = vrot.slane %v1224, 1
        %v1226 = vadd.f32 %v1224, %v1225
        %v1227 = vld [vmem:[#allocation2] sm:$0x1]
        %1229 = vset.pattern.permute.xlu0 0
        %1230 = vperm.xlu0 %1229, %v1227
        %v1231 = vpop.permute.xlu0 %1230
        %v1233 = vlaneseq
        %v1234 = vshrl.u32 %v1233, 7
        %v1235 = vsub.s32 0, %v1234
        %v1236 = vrot.slane %v1231, %v1235
        %v1237 = vadd.f32 %v1213, %v1236
        %v1238 = vadd.f32 %v1226, %v1236
        %v1241 = vcombine.low %v1237, %v1238
        %v1243 = vunpack.c.l.s4 1966171168
        %v1244 = vunpack.c.0.s8 %v1243
        %v1245 = vlaneseq
        %v1246 = vshrl.u32 %v1245, 7
        %v1247 = vsub.s32 %v1244, %v1246
        %v1248 = vrot.slane %v1241, %v1247
        %v1250 = vunpack.c.l.s4 1966171168
        %v1251 = vunpack.c.0.s8 %v1250
        %v1252 = vlaneseq
        %v1253 = vshrl.u32 %v1252, 7
        %v1254 = vsub.s32 %v1251, %v1253
        %v1255 = vrot.slane %v1248, %v1254
        %v1257 = vlaneseq
        %vm1258 = vcmp.ge.s32.totalorder %v1257, 0
        %vm1259 = vcmp.lt.s32.totalorder %v1257, 256
        %vm1260 = vmand %vm1258, %vm1259
        %1261 = vst.msk [vmem:[%s286] sm:$0x3] %vm1260, %v1255
        %s1262 = sand.u32 %s183, 1
        %s1263 = scalar_lea.sflag [#allocation4], %s1262
        %s1264 = sand.u32 %s183, 1
        %s1265 = smul.addr %s1264, 2
        %s1266 = scalar_lea.vmem [#allocation3], %s1265
        // Predicated region
        $region49: #{tpu_custom_call.1} parent=47 // pred_check
          %p1267 = pneg %p193
        $region50: #{tpu_custom_call.1} parent=47 // pred_check_branch
          %1269 = sbr.rel (%p1267) target = $region52
        $region51: #{tpu_custom_call.1} parent=47 // pred_region
          %s1270 = smul.u32 2, %s23
          %s1272 = ssub.s32 32, 32
          %1273 = vsyncadd %s1263, %s1272
          %s1274 = smul.addr %s1270, 16
          %s1275 = scalar_lea.hbm %s7, %s1274
          %s1277 = sshll.u32 %s1266, 4
          %s1278 = int_to_ptr.vmem [resolvable:$true] %s1277
          %1280 = dma.vmem_to_hbm [thread:$0]  %s1278, 32, %s1275, %s1263
        $region52: #{tpu_custom_call.1} parent=47 // pred_fallthru
          _
      $region48: #{tpu_custom_call.1} parent=5 // pred_fallthru
        _
      %p1281 = scmp.le.s32.totalorder 2, %s18
      // Predicated region
      $region53: #{tpu_custom_call.1} parent=5 // pred_check
        %p1282 = pneg %p1281
      $region54: #{tpu_custom_call.1} parent=5 // pred_check_branch
        %1284 = sbr.rel (%p1282) target = $region56
      $region55: #{tpu_custom_call.1} parent=5 // pred_region
        %s1285 = ssub.s32 %s18, 2
        // Predicated region
        $region57: #{tpu_custom_call.1} parent=55 // pred_check
          %p1286 = pneg %p199
        $region58: #{tpu_custom_call.1} parent=55 // pred_check_branch
          %1288 = sbr.rel (%p1286) target = $region60
        $region59: #{tpu_custom_call.1} parent=55 // pred_region
          %s1289 = sand.u32 %s184, 1
          %s1290 = scalar_lea.sflag [#allocation4], %s1289
          %s1291 = sand.u32 %s184, 1
          %s1292 = smul.addr %s1291, 2
          %s1293 = scalar_lea.vmem [#allocation3], %s1292
          %1294 = dma.done %s1290, 32
        $region60: #{tpu_custom_call.1} parent=55 // pred_fallthru
          _
      $region56: #{tpu_custom_call.1} parent=5 // pred_fallthru
        _
    $region6: #{tpu_custom_call.1} parent=1 // loop_footer
      %s22 = sadd.s32 1, %s18
    $region7: #{tpu_custom_call.1} parent=1 // loop_footer_branch
      %17 = sbr.rel target = $region3
    $region8: #{tpu_custom_call.1} parent=1 // loop_exit
      _
    %1295 = vsyncpa [#allocation4], 1
    %s1296 = scalar_lea.sflag [#allocation4], 1
    %1297 = vsyncpa %s1296, 1

</llo_original>
